<compile_context>
chip_gen: v6e
topology: v6e:2x2x1
jax: 0.10.0
libtpu: 0.0.40
codegen_flags: <defaults>
</compile_context>

<pallas_src>
import jax
import jax.numpy as jnp
from jax.experimental import pallas as pl
from jax.experimental.pallas import tpu as pltpu


def _round_up(n, m):
    return ((n + m - 1) // m) * m


def _pick_row_tile(rows, hidden, target=256, h_budget_bytes=4 * 1024 * 1024):
    """Pick the row (token) tile for the flattened (batch*seq, dim) layout."""
    # Cap so the f32 intermediate (rt, hidden) stays within a few MiB of VMEM.
    cap = max(16, h_budget_bytes // max(4 * hidden, 1))
    rt = min(target, cap)
    rt = max(16, (rt // 16) * 16)          # multiple of 16 (bf16 sublane pairs)
    rt = min(rt, _round_up(rows, 16))      # don't tile past the data
    # Prefer >= 2 grid steps so v7x megacore can shard the (parallel) row axis.
    while rt > 16 and -(-rows // rt) < 2:
        rt = max(16, ((rt // 2) // 16) * 16)
    return rt


def _chunk_ffn_kernel(x_ref, w1_ref, b1_ref, w2_ref, b2_ref, o_ref):
    # x_ref: (rows_tile, dim) tile in the input dtype.  Weights/biases are
    # resident in VMEM (single-buffered; their block index never changes).
    x = x_ref[...].astype(jnp.bfloat16)                            # in-kernel cast
    h = jnp.dot(x, w1_ref[...], preferred_element_type=jnp.float32)
    h = h + b1_ref[...]                                            # f32 bias
    # TODO(synk): PyTorch F.gelu defaults to the exact erf GELU; the tanh
    # approximation is used here for a guaranteed EUP lowering on TPU.
    h = jax.nn.gelu(h, approximate=True)                           # f32
    # TODO(synk): for very large `hidden`, block this (rows_tile, hidden) f32
    # intermediate with an inner fori_loop over hidden tiles instead of
    # materializing it whole.
    y = jnp.dot(h.astype(w2_ref.dtype), w2_ref[...],
                preferred_element_type=jnp.float32)
    y = y + b2_ref[...]                                            # f32 bias
    o_ref[...] = y.astype(o_ref.dtype)


def chunk_feedforward(x, w1, b1, w2, b2, *, chunks=1, row_tile=None):
    """Equivalent of Chunk(chunks, FeedForward, along_dim=-2)(x).

    The wrapped FeedForward is per-token, so the result is independent of
    `chunks` (kept for API fidelity; torch.chunk's ragged last chunk is also
    irrelevant here for the same reason).
    """
    del chunks  # result is chunking-invariant for a per-token fn
    batch, seq, dim = x.shape
    hidden = w1.shape[1]
    rows = batch * seq

    rt = row_tile if row_tile is not None else _pick_row_tile(rows, hidden)
    padded = _round_up(rows, rt)

    xf = x.reshape(rows, dim)              # contiguous reshape: no copy
    if padded != rows:
        xf = jnp.pad(xf, ((0, padded - rows), (0, 0)))

    # bf16 weights for the MXU (one-time cast, loaded once into VMEM);
    # activations stay in their native dtype and are cast inside the kernel.
    w1_bf = w1.astype(jnp.bfloat16)
    w2_bf = w2.astype(jnp.bfloat16)
    b1_f = b1.astype(jnp.float32).reshape(1, hidden)
    b2_f = b2.astype(jnp.float32).reshape(1, dim)

    grid = (padded // rt,)

    # VMEM budget: double-buffered activation I/O + single-buffered weights
    # + the f32/bf16 (rt, hidden) intermediates, with 2x headroom (min 16 MiB,
    # capped at v7x's 64 MiB physical VMEM).
    x_bytes = jnp.dtype(x.dtype).itemsize
    io_bytes = rt * dim * (x_bytes + x_bytes) * 2
    w_bytes = (dim * hidden + hidden * dim) * 2 + (hidden + dim) * 4
    h_bytes = rt * hidden * (4 + 2)
    vmem_limit = int(min(64 * 2 ** 20,
                         max(16 * 2 ** 20, 2 * (io_bytes + w_bytes + h_bytes))))

    resident = dict(pipeline_mode=pl.Buffered(1))  # constant block -> 1 buffer
    kernel = pl.pallas_call(
        _chunk_ffn_kernel,
        out_shape=jax.ShapeDtypeStruct((padded, dim), x.dtype),
        grid_spec=pltpu.PrefetchScalarGridSpec(
            num_scalar_prefetch=0,
            grid=grid,
            in_specs=[
                # one row tile of tokens per grid step
                pl.BlockSpec((rt, dim), lambda r: (r, 0)),
                # weights / biases: full arrays, resident, single-buffered
                pl.BlockSpec((dim, hidden), lambda r: (0, 0), **resident),
                pl.BlockSpec((1, hidden), lambda r: (0, 0), **resident),
                pl.BlockSpec((hidden, dim), lambda r: (0, 0), **resident),
                pl.BlockSpec((1, dim), lambda r: (0, 0), **resident),
            ],
            out_specs=pl.BlockSpec((rt, dim), lambda r: (r, 0)),
        ),
        compiler_params=pltpu.CompilerParams(
            dimension_semantics=("parallel",),
            vmem_limit_bytes=vmem_limit,
        ),
    )
    out = kernel(xf, w1_bf, b1_f, w2_bf, b2_f)
    return out[:rows].reshape(batch, seq, dim)


def _reference(x, w1, b1, w2, b2, *, chunks):
    """Pure-JAX reference mirroring PyTorch Chunk.forward (with the same
    bf16-operand / f32-accumulation FFN used inside the kernel)."""

    def fn(c):
        h = jnp.dot(c.astype(jnp.bfloat16), w1.astype(jnp.bfloat16),
                    preferred_element_type=jnp.float32) + b1
        h = jax.nn.gelu(h, approximate=True)
        y = jnp.dot(h.astype(jnp.bfloat16), w2.astype(jnp.bfloat16),
                    preferred_element_type=jnp.float32) + b2
        return y.astype(x.dtype)

    if chunks == 1:
        return fn(x)
    # torch.chunk allows a ragged last chunk -> array_split mirrors that.
    pieces = jnp.array_split(x, chunks, axis=-2)
    return jnp.concatenate([fn(c) for c in pieces], axis=-2)


if __name__ == "__main__":
    # Small shapes consistent with Reformer usage:
    batch, seq, dim, hidden, chunks = 2, 16, 32, 64, 2

    key = jax.random.PRNGKey(0)
    kx, k1, k2 = jax.random.split(key, 3)

    x = jax.random.normal(kx, (batch, seq, dim), dtype=jnp.float32)
    # Deterministic parameter init (Linear(dim, hidden) and Linear(hidden, dim)).
    w1 = jax.random.normal(k1, (dim, hidden), dtype=jnp.float32) * (1.0 / dim ** 0.5)
    b1 = jnp.zeros((1, hidden), dtype=jnp.float32)
    w2 = jax.random.normal(k2, (hidden, dim), dtype=jnp.float32) * (1.0 / hidden ** 0.5)
    b2 = jnp.zeros((1, dim), dtype=jnp.float32)

    out = chunk_feedforward(x, w1, b1, w2, b2, chunks=chunks)
    out = jax.block_until_ready(out)

    ref = _reference(x, w1, b1, w2, b2, chunks=chunks)
    assert out.shape == (batch, seq, dim)
    assert jnp.allclose(out, ref, atol=1e-2, rtol=1e-2), "mismatch vs reference"

    print("KERNEL_OK")
</pallas_src>

<mosaic_0001>
module attributes {stable_mosaic.version = 11 : i64} {
  func.func @_chunk_ffn_kernel(%arg0: i32, %arg1: memref<16x32xf32, #tpu.memory_space<vmem>>, %arg2: memref<32x64xbf16, #tpu.memory_space<vmem>>, %arg3: memref<1x64xf32, #tpu.memory_space<vmem>>, %arg4: memref<64x32xbf16, #tpu.memory_space<vmem>>, %arg5: memref<1x32xf32, #tpu.memory_space<vmem>>, %arg6: memref<16x32xf32, #tpu.memory_space<vmem>>) attributes {dimension_semantics = [#tpu.dimension_semantics<parallel>], iteration_bounds = array<i64: 2>, scalar_prefetch = 0 : i64, scratch_operands = 0 : i64, tpu.core_type = #tpu.core_type<tc>, window_params = [{transform_indices = @transform_0, window_bounds = array<i64: 16, 32>}, {pipeline_mode = #tpu.pipeline_mode<synchronous>, transform_indices = @transform_1, window_bounds = array<i64: 32, 64>}, {pipeline_mode = #tpu.pipeline_mode<synchronous>, transform_indices = @transform_2, window_bounds = array<i64: 1, 64>}, {pipeline_mode = #tpu.pipeline_mode<synchronous>, transform_indices = @transform_3, window_bounds = array<i64: 64, 32>}, {pipeline_mode = #tpu.pipeline_mode<synchronous>, transform_indices = @transform_4, window_bounds = array<i64: 1, 32>}, {transform_indices = @transform_5, window_bounds = array<i64: 16, 32>}]} {
    %c0 = arith.constant 0 : index
    %c0_0 = arith.constant 0 : index
    %0 = vector.load %arg1[%c0, %c0_0] : memref<16x32xf32, #tpu.memory_space<vmem>>, vector<16x32xf32>
    %1 = arith.truncf %0 : vector<16x32xf32> to vector<16x32xbf16>
    %c0_1 = arith.constant 0 : index
    %c0_2 = arith.constant 0 : index
    %2 = vector.load %arg2[%c0_1, %c0_2] : memref<32x64xbf16, #tpu.memory_space<vmem>>, vector<32x64xbf16>
    %cst = arith.constant dense<0.000000e+00> : vector<16x64xf32>
    %3 = tpu.matmul %1, %2, %cst {dimension_numbers = #tpu.dot_dimension_numbers<[1], [0], [0], [1], [0, 0, 1, 1], [], []>} : vector<16x32xbf16>, vector<32x64xbf16>, vector<16x64xf32> -> vector<16x64xf32>
    %c0_3 = arith.constant 0 : index
    %c0_4 = arith.constant 0 : index
    %4 = vector.load %arg3[%c0_3, %c0_4] : memref<1x64xf32, #tpu.memory_space<vmem>>, vector<1x64xf32>
    %5 = vector.broadcast %4 : vector<1x64xf32> to vector<16x64xf32>
    %6 = arith.addf %3, %5 : vector<16x64xf32>
    %7 = arith.mulf %6, %6 : vector<16x64xf32>
    %8 = arith.mulf %6, %7 : vector<16x64xf32>
    %cst_5 = arith.constant 4.471500e-02 : f32
    %9 = vector.broadcast %cst_5 : f32 to vector<16x64xf32>
    %10 = arith.mulf %9, %8 : vector<16x64xf32>
    %11 = arith.addf %6, %10 : vector<16x64xf32>
    %cst_6 = arith.constant 0.797884583 : f32
    %12 = vector.broadcast %cst_6 : f32 to vector<16x64xf32>
    %13 = arith.mulf %12, %11 : vector<16x64xf32>
    %14 = math.tanh %13 : vector<16x64xf32>
    %cst_7 = arith.constant 1.000000e+00 : f32
    %15 = vector.broadcast %cst_7 : f32 to vector<16x64xf32>
    %16 = arith.addf %15, %14 : vector<16x64xf32>
    %cst_8 = arith.constant 5.000000e-01 : f32
    %17 = vector.broadcast %cst_8 : f32 to vector<16x64xf32>
    %18 = arith.mulf %17, %16 : vector<16x64xf32>
    %19 = arith.mulf %6, %18 : vector<16x64xf32>
    %20 = arith.truncf %19 : vector<16x64xf32> to vector<16x64xbf16>
    %c0_9 = arith.constant 0 : index
    %c0_10 = arith.constant 0 : index
    %21 = vector.load %arg4[%c0_9, %c0_10] : memref<64x32xbf16, #tpu.memory_space<vmem>>, vector<64x32xbf16>
    %cst_11 = arith.constant dense<0.000000e+00> : vector<16x32xf32>
    %22 = tpu.matmul %20, %21, %cst_11 {dimension_numbers = #tpu.dot_dimension_numbers<[1], [0], [0], [1], [0, 0, 1, 1], [], []>} : vector<16x64xbf16>, vector<64x32xbf16>, vector<16x32xf32> -> vector<16x32xf32>
    %c0_12 = arith.constant 0 : index
    %c0_13 = arith.constant 0 : index
    %23 = vector.load %arg5[%c0_12, %c0_13] : memref<1x32xf32, #tpu.memory_space<vmem>>, vector<1x32xf32>
    %24 = vector.broadcast %23 : vector<1x32xf32> to vector<16x32xf32>
    %25 = arith.addf %22, %24 : vector<16x32xf32>
    %c0_14 = arith.constant 0 : index
    %c0_15 = arith.constant 0 : index
    %26 = vector.load %arg6[%c0_14, %c0_15] : memref<16x32xf32, #tpu.memory_space<vmem>>, vector<16x32xf32>
    tpu.vector_store %arg6[%c0_14, %c0_15], %25 {strides = array<i32>} : memref<16x32xf32, #tpu.memory_space<vmem>>, vector<16x32xf32>,
    return
  }
  func.func @transform_0(%arg0: i32) -> (i32, i32) {
    %c0_i32 = arith.constant 0 : i32
    %c0_i32_0 = arith.constant 0 : i32
    return %arg0, %c0_i32 : i32, i32
  }
  func.func @transform_1(%arg0: i32) -> (i32, i32) {
    %c0_i32 = arith.constant 0 : i32
    %c0_i32_0 = arith.constant 0 : i32
    %c0_i32_1 = arith.constant 0 : i32
    return %c0_i32, %c0_i32_0 : i32, i32
  }
  func.func @transform_2(%arg0: i32) -> (i32, i32) {
    %c0_i32 = arith.constant 0 : i32
    %c0_i32_0 = arith.constant 0 : i32
    %c0_i32_1 = arith.constant 0 : i32
    return %c0_i32, %c0_i32_0 : i32, i32
  }
  func.func @transform_3(%arg0: i32) -> (i32, i32) {
    %c0_i32 = arith.constant 0 : i32
    %c0_i32_0 = arith.constant 0 : i32
    %c0_i32_1 = arith.constant 0 : i32
    return %c0_i32, %c0_i32_0 : i32, i32
  }
  func.func @transform_4(%arg0: i32) -> (i32, i32) {
    %c0_i32 = arith.constant 0 : i32
    %c0_i32_0 = arith.constant 0 : i32
    %c0_i32_1 = arith.constant 0 : i32
    return %c0_i32, %c0_i32_0 : i32, i32
  }
  func.func @transform_5(%arg0: i32) -> (i32, i32) {
    %c0_i32 = arith.constant 0 : i32
    %c0_i32_0 = arith.constant 0 : i32
    return %arg0, %c0_i32 : i32, i32
  }
}

</mosaic_0001>

<llo_original>
// kernel: tpu_custom_call.1
$region0: #{tpu_custom_call.1}
  #allocation0 [shape = 'u32[]', space=smem, size = 0x4, offset = 0x4, fixed_abs, tag = 'smem constant byte address 0x4 - core index']
  #allocation1 [shape = 'u32[144,128]{1,0:T(1,128)}', space=vmem, size = 0x12000, scoped, tag = 'internal scratch']
  %s0 = inlined_call_operand.vmem [shape: f32[32,32], index: 0, kind: input, shape index: {}]
  %s1 = inlined_call_operand.vmem [shape: bf16[32,64], index: 1, kind: input, shape index: {}]
  %s2 = inlined_call_operand.vmem [shape: f32[1,64], index: 2, kind: input, shape index: {}]
  %s3 = inlined_call_operand.vmem [shape: bf16[64,32], index: 3, kind: input, shape index: {}]
  %s4 = inlined_call_operand.vmem [shape: f32[1,32], index: 4, kind: input, shape index: {}]
  %s5 = inlined_call_operand.hbm [shape: f32[32,32], index: 5, kind: output, shape index: {}]
  %s6 = sld [smem:[#allocation0]]
  $region53: #{tpu_custom_call.1} parent=0
    _
  %s8 = ssub.s32 1, %s6
  %s9 = scalar_select 0, %s8, %s6
  $region1: #{tpu_custom_call.1} parent=0
    #allocation2 [shape = 'u8[16384]{0}', space=vmem, size = 0x4000, scoped, tag = 'output window, operand 0']
    #allocation3 [shape = 's32[2]{0}', space=sflag, size = 0x8, scoped, tag = 'scoped memory for tpu_custom_call.1']
    %10 = vsyncpa [#allocation3], 0
    %s11 = scalar_lea.sflag [#allocation3], 1
    %12 = vsyncpa %s11, 0
    loop: start=0, step=1, limit=4
    $region2: #{tpu_custom_call.1} parent=1 // loop_pre_header
      _
    $region3: #{tpu_custom_call.1} parent=1 // loop_header
      %s14 = sphi 0, %s18
      %p15 = scmp.ge.s32.totalorder %s14, 4
      %s24 = sphi 0, %s26
      %s27 = sphi 0, %s24
      %s28 = sphi 0, %s27
      %s44 = sphi 0, %s28
      %s48 = sphi 0, %s48
      %s50 = sphi 0, %s48
      %s51 = sphi 0, %s50
      %s65 = sphi 0, %s51
      %s69 = sphi 0, %s69
      %s71 = sphi 0, %s69
      %s72 = sphi 0, %s71
      %s86 = sphi 0, %s72
      %s90 = sphi 0, %s90
      %s92 = sphi 0, %s90
      %s93 = sphi 0, %s92
      %s107 = sphi 0, %s93
      %s111 = sphi 0, %s111
      %s113 = sphi 0, %s111
      %s114 = sphi 0, %s113
      %s128 = sphi 0, %s114
      %s134 = sphi 0, %s136
      %s137 = sphi 0, %s134
      %s138 = sphi 0, %s137
      %s154 = sphi 0, %s138
    $region4: #{tpu_custom_call.1} parent=1 // loop_header_branch
      %17 = sbr.rel (%p15) target = $region8
    $region5: #{tpu_custom_call.1} parent=1 // loop_body
      %s19 = ssub.s32 %s14, 1
      %s20 = ssub.s32 %s14, 2
      %s21 = sadd.s32 %s14, 1
      %s22 = ssub.s32 %s14, %s21
      %p23 = scmp.eq.s32.totalorder %s22, 0
      %s25 = sadd.s32 %s24, 1
      %s26 = scalar_select %p23, %s24, %s25
      %p29 = pneg %p23
      %p30 = scmp.eq.s32.totalorder %s14, 1
      %p31 = por %p29, %p30
      %p32 = scmp.ne.s32.totalorder %s24, %s27
      %p33 = scmp.eq.s32.totalorder %s14, 0
      %p34 = por %p32, %p33
      %p35 = scmp.ne.s32.totalorder %s24, %s27
      %p36 = scmp.eq.s32.totalorder %s19, 1
      %p37 = por %p35, %p36
      %p38 = scmp.ne.s32.totalorder %s27, %s28
      %p39 = scmp.eq.s32.totalorder %s19, 0
      %p40 = por %p38, %p39
      %p41 = scmp.ne.s32.totalorder %s27, %s28
      %p42 = scmp.eq.s32.totalorder %s20, 1
      %p43 = por %p41, %p42
      %p45 = scmp.ne.s32.totalorder %s28, %s44
      %p46 = scmp.eq.s32.totalorder %s20, 0
      %p47 = por %p45, %p46
      %s49 = sadd.s32 %s48, 1
      %p52 = scmp.eq.s32.totalorder %s14, 1
      %p53 = scmp.ne.s32.totalorder %s48, %s50
      %p54 = scmp.eq.s32.totalorder %s14, 0
      %p55 = por %p53, %p54
      %p56 = scmp.ne.s32.totalorder %s48, %s50
      %p57 = scmp.eq.s32.totalorder %s19, 1
      %p58 = por %p56, %p57
      %p59 = scmp.ne.s32.totalorder %s50, %s51
      %p60 = scmp.eq.s32.totalorder %s19, 0
      %p61 = por %p59, %p60
      %p62 = scmp.ne.s32.totalorder %s50, %s51
      %p63 = scmp.eq.s32.totalorder %s20, 1
      %p64 = por %p62, %p63
      %p66 = scmp.ne.s32.totalorder %s51, %s65
      %p67 = scmp.eq.s32.totalorder %s20, 0
      %p68 = por %p66, %p67
      %s70 = sadd.s32 %s69, 1
      %p73 = scmp.eq.s32.totalorder %s14, 1
      %p74 = scmp.ne.s32.totalorder %s69, %s71
      %p75 = scmp.eq.s32.totalorder %s14, 0
      %p76 = por %p74, %p75
      %p77 = scmp.ne.s32.totalorder %s69, %s71
      %p78 = scmp.eq.s32.totalorder %s19, 1
      %p79 = por %p77, %p78
      %p80 = scmp.ne.s32.totalorder %s71, %s72
      %p81 = scmp.eq.s32.totalorder %s19, 0
      %p82 = por %p80, %p81
      %p83 = scmp.ne.s32.totalorder %s71, %s72
      %p84 = scmp.eq.s32.totalorder %s20, 1
      %p85 = por %p83, %p84
      %p87 = scmp.ne.s32.totalorder %s72, %s86
      %p88 = scmp.eq.s32.totalorder %s20, 0
      %p89 = por %p87, %p88
      %s91 = sadd.s32 %s90, 1
      %p94 = scmp.eq.s32.totalorder %s14, 1
      %p95 = scmp.ne.s32.totalorder %s90, %s92
      %p96 = scmp.eq.s32.totalorder %s14, 0
      %p97 = por %p95, %p96
      %p98 = scmp.ne.s32.totalorder %s90, %s92
      %p99 = scmp.eq.s32.totalorder %s19, 1
      %p100 = por %p98, %p99
      %p101 = scmp.ne.s32.totalorder %s92, %s93
      %p102 = scmp.eq.s32.totalorder %s19, 0
      %p103 = por %p101, %p102
      %p104 = scmp.ne.s32.totalorder %s92, %s93
      %p105 = scmp.eq.s32.totalorder %s20, 1
      %p106 = por %p104, %p105
      %p108 = scmp.ne.s32.totalorder %s93, %s107
      %p109 = scmp.eq.s32.totalorder %s20, 0
      %p110 = por %p108, %p109
      %s112 = sadd.s32 %s111, 1
      %p115 = scmp.eq.s32.totalorder %s14, 1
      %p116 = scmp.ne.s32.totalorder %s111, %s113
      %p117 = scmp.eq.s32.totalorder %s14, 0
      %p118 = por %p116, %p117
      %p119 = scmp.ne.s32.totalorder %s111, %s113
      %p120 = scmp.eq.s32.totalorder %s19, 1
      %p121 = por %p119, %p120
      %p122 = scmp.ne.s32.totalorder %s113, %s114
      %p123 = scmp.eq.s32.totalorder %s19, 0
      %p124 = por %p122, %p123
      %p125 = scmp.ne.s32.totalorder %s113, %s114
      %p126 = scmp.eq.s32.totalorder %s20, 1
      %p127 = por %p125, %p126
      %p129 = scmp.ne.s32.totalorder %s114, %s128
      %p130 = scmp.eq.s32.totalorder %s20, 0
      %p131 = por %p129, %p130
      %s132 = ssub.s32 %s14, %s21
      %p133 = scmp.eq.s32.totalorder %s132, 0
      %s135 = sadd.s32 %s134, 1
      %s136 = scalar_select %p133, %s134, %s135
      %p139 = pneg %p133
      %p140 = scmp.eq.s32.totalorder %s14, 1
      %p141 = por %p139, %p140
      %p142 = scmp.ne.s32.totalorder %s134, %s137
      %p143 = scmp.eq.s32.totalorder %s14, 0
      %p144 = por %p142, %p143
      %p145 = scmp.ne.s32.totalorder %s134, %s137
      %p146 = scmp.eq.s32.totalorder %s19, 1
      %p147 = por %p145, %p146
      %p148 = scmp.ne.s32.totalorder %s137, %s138
      %p149 = scmp.eq.s32.totalorder %s19, 0
      %p150 = por %p148, %p149
      %p151 = scmp.ne.s32.totalorder %s137, %s138
      %p152 = scmp.eq.s32.totalorder %s20, 1
      %p153 = por %p151, %p152
      %p155 = scmp.ne.s32.totalorder %s138, %s154
      %p156 = scmp.eq.s32.totalorder %s20, 0
      %p157 = por %p155, %p156
      %p158 = scmp.le.s32.totalorder 1, %s14
      %p159 = scmp.lt.s32.totalorder %s14, 3
      %p160 = pnand %p158, %p159
      %p161 = pneg %p160
      // Predicated region
      $region9: #{tpu_custom_call.1} parent=5 // pred_check
        _
      $region10: #{tpu_custom_call.1} parent=5 // pred_check_branch
        %163 = sbr.rel (%p160) target = $region12
      $region11: #{tpu_custom_call.1} parent=5 // pred_region
        %s164 = ssub.s32 %s14, 1
        // Predicated region
        $region13: #{tpu_custom_call.1} parent=11 // pred_check
          %p165 = pneg %p61
        $region14: #{tpu_custom_call.1} parent=11 // pred_check_branch
          %167 = sbr.rel (%p165) target = $region16
        $region15: #{tpu_custom_call.1} parent=11 // pred_region
          _
        $region16: #{tpu_custom_call.1} parent=11 // pred_fallthru
          _
        // Predicated region
        $region17: #{tpu_custom_call.1} parent=11 // pred_check
          %p168 = pneg %p82
        $region18: #{tpu_custom_call.1} parent=11 // pred_check_branch
          %170 = sbr.rel (%p168) target = $region20
        $region19: #{tpu_custom_call.1} parent=11 // pred_region
          _
        $region20: #{tpu_custom_call.1} parent=11 // pred_fallthru
          _
        // Predicated region
        $region21: #{tpu_custom_call.1} parent=11 // pred_check
          %p171 = pneg %p103
        $region22: #{tpu_custom_call.1} parent=11 // pred_check_branch
          %173 = sbr.rel (%p171) target = $region24
        $region23: #{tpu_custom_call.1} parent=11 // pred_region
          _
        $region24: #{tpu_custom_call.1} parent=11 // pred_fallthru
          _
        // Predicated region
        $region25: #{tpu_custom_call.1} parent=11 // pred_check
          %p174 = pneg %p124
        $region26: #{tpu_custom_call.1} parent=11 // pred_check_branch
          %176 = sbr.rel (%p174) target = $region28
        $region27: #{tpu_custom_call.1} parent=11 // pred_region
          _
        $region28: #{tpu_custom_call.1} parent=11 // pred_fallthru
          _
      $region12: #{tpu_custom_call.1} parent=5 // pred_fallthru
        _
      %p177 = scmp.lt.s32.totalorder %s14, 2
      // Predicated region
      $region29: #{tpu_custom_call.1} parent=5 // pred_check
        %p178 = pneg %p177
      $region30: #{tpu_custom_call.1} parent=5 // pred_check_branch
        %180 = sbr.rel (%p178) target = $region32
      $region31: #{tpu_custom_call.1} parent=5 // pred_region
        // Predicated region
        $region33: #{tpu_custom_call.1} parent=31 // pred_check
          %p181 = pneg %p34
        $region34: #{tpu_custom_call.1} parent=31 // pred_check_branch
          %183 = sbr.rel (%p181) target = $region36
        $region35: #{tpu_custom_call.1} parent=31 // pred_region
          %s184 = smul.u32 2, %s14
          %p185 = scmp.lt.s32.totalorder %s184, 3
          %s186 = scalar_select %p185, %s184, 3
          %s187 = smul.addr %s186, 8
          %s188 = scalar_lea.vmem %s0, %s187
          %s189 = smul.u32 2, %s14
        $region36: #{tpu_custom_call.1} parent=31 // pred_fallthru
          _
      $region32: #{tpu_custom_call.1} parent=5 // pred_fallthru
        _
      %p190 = scmp.le.s32.totalorder 1, %s14
      %p191 = scmp.lt.s32.totalorder %s14, 3
      %p192 = pnand %p190, %p191
      %p193 = pneg %p192
      // Predicated region
      $region37: #{tpu_custom_call.1} parent=5 // pred_check
        _
      $region38: #{tpu_custom_call.1} parent=5 // pred_check_branch
        %195 = sbr.rel (%p192) target = $region40
      $region39: #{tpu_custom_call.1} parent=5 // pred_region
        %s196 = ssub.s32 %s14, 1
        %s197 = smul.u32 2, %s19
        %p198 = scmp.lt.s32.totalorder %s197, 3
        %s199 = scalar_select %p198, %s197, 3
        %s200 = smul.addr %s199, 8
        %s201 = scalar_lea.vmem %s0, %s200
        %p202 = pneg %p40
        %p203 = pneg %p37
        %p204 = pneg %p61
        %p205 = pneg %p58
        %p206 = pneg %p82
        %p207 = pneg %p79
        %p208 = pneg %p103
        %p209 = pneg %p100
        %p210 = pneg %p124
        %p211 = pneg %p121
        %p212 = pneg %p150
        %p213 = pneg %p147
        %s214 = sand.u32 %s137, 1
        %s215 = scalar_lea.sflag [#allocation3], %s214
        %s216 = sand.u32 %s137, 1
        %s217 = smul.addr %s216, 16
        %s218 = scalar_lea.vmem [#allocation2], %s217
        %s219 = smul.u32 2, %s19
        %p220 = scmp.lt.s32.totalorder %s219, 3
        %s221 = scalar_select %p220, %s219, 3
        %s222 = smul.addr %s221, 8
        %s223 = scalar_lea.vmem %s0, %s222
        %s224 = smul.u32 2, %s19
        %s225 = smul.u32 2, %s19
        %v227 = vld [vmem:[%s223] sm:$0xff]
        %v228 = vld [vmem:[%s223 + $0x8] sm:$0xff]
        %v229 = vpack.c.bf16 %v228, %v227
        %v230 = vld [vmem:[%s1] sm:$0xf]
        %v231 = vld [vmem:[%s1 + $0x4] sm:$0xf]
        %v232 = vld [vmem:[%s1 + $0x8] sm:$0xf]
        %v233 = vld [vmem:[%s1 + $0xc] sm:$0xf]
        %v234 = vld [vmem:[%s2] sm:$0x1]
        %v236 = vlaneseq
        %v237 = vshrl.u32 %v236, 7
        %v238 = vsub.s32 0, %v237
        %v239 = vrot.slane %v234, %v238
        %v245 = vunpack.c.l.b16 %v230
        %v246 = vunpack.c.l.b16 %v231
        %v247 = vunpack.c.l.b16 %v232
        %v248 = vunpack.c.l.b16 %v233
        %v249 = vpack.c.b16 %v246, %v245
        %v250 = vpack.c.b16 %v248, %v247
        %vm253 = vcmask 261120
        %v255 = vsel %vm253, %v229, 0
        %257 = vmatprep.subr.bf16.mxu0 0
        %258 = vmatpush1.bf16.msra.mxu0 0
        %259 = vmatprep.subr.bf16.mxu0 0
        %260 = vmatpush1.bf16.msra.mxu0 0
        %261 = vmatprep.subr.bf16.mxu0 0
        %262 = vmatpush1.bf16.msra.mxu0 0
        %263 = vmatprep.subr.bf16.mxu0 0
        %264 = vmatpush1.bf16.msra.mxu0 0
        %265 = vmatprep.subr.bf16.mxu0 0
        %266 = vmatpush1.bf16.msra.mxu0 0
        %267 = vmatprep.subr.bf16.mxu0 0
        %268 = vmatpush1.bf16.msra.mxu0 0
        %269 = vmatprep.subr.bf16.mxu0 0
        %270 = vmatpush1.bf16.msra.mxu0 %v250
        %271 = vmatprep.subr.bf16.mxu0 0
        %272 = vmatpush1.bf16.msra.mxu0 %v249
        %273 = vmatprep.subr.bf16.mxu0 0
        %274 = vmatpush2.bf16.msra.mxu0 0
        %275 = vmatprep.subr.bf16.mxu0 0
        %276 = vmatpush2.bf16.msra.mxu0 0
        %277 = vmatprep.subr.bf16.mxu0 0
        %278 = vmatpush2.bf16.msra.mxu0 0
        %279 = vmatprep.subr.bf16.mxu0 0
        %280 = vmatpush2.bf16.msra.mxu0 0
        %281 = vmatprep.subr.bf16.mxu0 0
        %282 = vmatpush2.bf16.msra.mxu0 0
        %283 = vmatprep.subr.bf16.mxu0 0
        %284 = vmatpush2.bf16.msra.mxu0 0
        %285 = vmatprep.subr.bf16.mxu0 0
        %286 = vmatpush2.bf16.msra.mxu0 0
        %287 = vmatprep.subr.bf16.mxu0 0
        %288 = vmatpush2.bf16.msra.mxu0 0
        %289 = vmatprep.mubr.bf16.mxu0 0
        %290 = vmatmul.mubr.bf16.gmra.mxu0 %v255
        %v291 = vpop.f32.mrf.mxu0
        %v292 = vadd.f32 %v239, %v291
        %v293 = vpop.f32.mrf.mxu0
        %v294 = vpop.f32.mrf.mxu0
        %v295 = vadd.f32 %v239, %v294
        %v296 = vpop.f32.mrf.mxu0
        %297 = vdwg.mxu0
        %v298 = vmul.f32 %v292, %v292
        %v299 = vmul.f32 %v295, %v295
        %v300 = vmul.f32 %v292, %v298
        %v301 = vmul.f32 %v295, %v299
        %v302 = vmul.f32 %v300, 0.044715
        %v303 = vmul.f32 %v301, 0.044715
        %v304 = vadd.f32 %v292, %v302
        %v305 = vadd.f32 %v295, %v303
        %v306 = vmul.f32 %v304, 0.7978846
        %v307 = vmul.f32 %v305, 0.7978846
        %v308 = vtanh.pop %v306
        %v309 = vtanh.pop %v307
        %v310 = vadd.f32 %v308, 1.0
        %v311 = vadd.f32 %v309, 1.0
        %v312 = vmul.f32 %v310, 0.5
        %v313 = vmul.f32 %v311, 0.5
        %v314 = vmul.f32 %v292, %v312
        %v315 = vmul.f32 %v295, %v313
        %v316 = vpack.c.bf16 %v315, %v314
        %v317 = vld [vmem:[%s3] sm:$0xf]
        %v318 = vld [vmem:[%s3 + $0x4] sm:$0xf]
        %v319 = vld [vmem:[%s3 + $0x8] sm:$0xf]
        %v320 = vld [vmem:[%s3 + $0xc] sm:$0xf]
        %v321 = vld [vmem:[%s3 + $0x10] sm:$0xf]
        %v322 = vld [vmem:[%s3 + $0x14] sm:$0xf]
        %v323 = vld [vmem:[%s3 + $0x18] sm:$0xf]
        %v324 = vld [vmem:[%s3 + $0x1c] sm:$0xf]
        %v325 = vld [vmem:[%s4] sm:$0x1]
        %v327 = vlaneseq
        %v328 = vshrl.u32 %v327, 7
        %v329 = vsub.s32 0, %v328
        %v330 = vrot.slane %v325, %v329
        %v340 = vunpack.c.l.b16 %v317
        %v341 = vunpack.c.l.b16 %v318
        %v342 = vunpack.c.l.b16 %v319
        %v343 = vunpack.c.l.b16 %v320
        %v344 = vunpack.c.l.b16 %v321
        %v345 = vunpack.c.l.b16 %v322
        %v346 = vunpack.c.l.b16 %v323
        %v347 = vunpack.c.l.b16 %v324
        %v348 = vpack.c.b16 %v341, %v340
        %v349 = vpack.c.b16 %v343, %v342
        %v350 = vpack.c.b16 %v345, %v344
        %v351 = vpack.c.b16 %v347, %v346
        %vm356 = vcmask 523264
        %v358 = vsel %vm356, %v316, 0
        %360 = vmatprep.subr.bf16.mxu0 0
        %361 = vmatpush1.bf16.msra.mxu0 0
        %362 = vmatprep.subr.bf16.mxu0 0
        %363 = vmatpush1.bf16.msra.mxu0 0
        %364 = vmatprep.subr.bf16.mxu0 0
        %365 = vmatpush1.bf16.msra.mxu0 0
        %366 = vmatprep.subr.bf16.mxu0 0
        %367 = vmatpush1.bf16.msra.mxu0 0
        %368 = vmatprep.subr.bf16.mxu0 0
        %369 = vmatpush1.bf16.msra.mxu0 %v351
        %370 = vmatprep.subr.bf16.mxu0 0
        %371 = vmatpush1.bf16.msra.mxu0 %v350
        %372 = vmatprep.subr.bf16.mxu0 0
        %373 = vmatpush1.bf16.msra.mxu0 %v349
        %374 = vmatprep.subr.bf16.mxu0 0
        %375 = vmatpush1.bf16.msra.mxu0 %v348
        %376 = vmatprep.subr.bf16.mxu0 0
        %377 = vmatpush2.bf16.msra.mxu0 0
        %378 = vmatprep.subr.bf16.mxu0 0
        %379 = vmatpush2.bf16.msra.mxu0 0
        %380 = vmatprep.subr.bf16.mxu0 0
        %381 = vmatpush2.bf16.msra.mxu0 0
        %382 = vmatprep.subr.bf16.mxu0 0
        %383 = vmatpush2.bf16.msra.mxu0 0
        %384 = vmatprep.subr.bf16.mxu0 0
        %385 = vmatpush2.bf16.msra.mxu0 0
        %386 = vmatprep.subr.bf16.mxu0 0
        %387 = vmatpush2.bf16.msra.mxu0 0
        %388 = vmatprep.subr.bf16.mxu0 0
        %389 = vmatpush2.bf16.msra.mxu0 0
        %390 = vmatprep.subr.bf16.mxu0 0
        %391 = vmatpush2.bf16.msra.mxu0 0
        %392 = vmatprep.mubr.bf16.mxu0 0
        %393 = vmatmul.mubr.bf16.gmra.mxu0 %v358
        %v394 = vpop.f32.mrf.mxu0
        %v395 = vadd.f32 %v330, %v394
        %v396 = vpop.f32.mrf.mxu0
        %v397 = vpop.f32.mrf.mxu0
        %v398 = vadd.f32 %v330, %v397
        %v399 = vpop.f32.mrf.mxu0
        %400 = vdwg.mxu0
        %401 = vst.msk [vmem:[%s218] sm:$0xff] %vm253, %v395
        %402 = vst.msk [vmem:[%s218 + $0x8] sm:$0xff] %vm253, %v398
        %s403 = sand.u32 %s137, 1
        %s404 = scalar_lea.sflag [#allocation3], %s403
        %s405 = sand.u32 %s137, 1
        %s406 = smul.addr %s405, 16
        %s407 = scalar_lea.vmem [#allocation2], %s406
        // Predicated region
        $region41: #{tpu_custom_call.1} parent=39 // pred_check
          %p408 = pneg %p147
        $region42: #{tpu_custom_call.1} parent=39 // pred_check_branch
          %410 = sbr.rel (%p408) target = $region44
        $region43: #{tpu_custom_call.1} parent=39 // pred_region
          %s411 = smul.u32 2, %s19
          %s413 = ssub.s32 256, 256
          %414 = vsyncadd %s404, %s413
          %s415 = smul.addr %s411, 128
          %s416 = scalar_lea.hbm %s5, %s415
          %s417 = sshll.u32 %s407, 4
          %s418 = int_to_ptr.vmem [resolvable:$true] %s417
          %423 = dma.vmem_to_hbm [thread:$0]  %s418, 256, %s416, %s404, 128, 128, 8
        $region44: #{tpu_custom_call.1} parent=39 // pred_fallthru
          _
      $region40: #{tpu_custom_call.1} parent=5 // pred_fallthru
        _
      %p424 = scmp.le.s32.totalorder 2, %s14
      // Predicated region
      $region45: #{tpu_custom_call.1} parent=5 // pred_check
        %p425 = pneg %p424
      $region46: #{tpu_custom_call.1} parent=5 // pred_check_branch
        %427 = sbr.rel (%p425) target = $region48
      $region47: #{tpu_custom_call.1} parent=5 // pred_region
        %s428 = ssub.s32 %s14, 2
        // Predicated region
        $region49: #{tpu_custom_call.1} parent=47 // pred_check
          %p429 = pneg %p153
        $region50: #{tpu_custom_call.1} parent=47 // pred_check_branch
          %431 = sbr.rel (%p429) target = $region52
        $region51: #{tpu_custom_call.1} parent=47 // pred_region
          %s432 = sand.u32 %s138, 1
          %s433 = scalar_lea.sflag [#allocation3], %s432
          %s434 = sand.u32 %s138, 1
          %s435 = smul.addr %s434, 16
          %s436 = scalar_lea.vmem [#allocation2], %s435
          %437 = dma.done %s433, 256
        $region52: #{tpu_custom_call.1} parent=47 // pred_fallthru
          _
      $region48: #{tpu_custom_call.1} parent=5 // pred_fallthru
        _
    $region6: #{tpu_custom_call.1} parent=1 // loop_footer
      %s18 = sadd.s32 1, %s14
    $region7: #{tpu_custom_call.1} parent=1 // loop_footer_branch
      %13 = sbr.rel target = $region3
    $region8: #{tpu_custom_call.1} parent=1 // loop_exit
      _
    %438 = vsyncpa [#allocation3], 1
    %s439 = scalar_lea.sflag [#allocation3], 1
    %440 = vsyncpa %s439, 1

</llo_original>
